<compile_context>
chip_gen: v5e
topology: v5e:2x2
jax: 0.10.0
libtpu: 0.0.40
codegen_flags: <defaults>
</compile_context>

<pallas_src>
import functools

import jax
import jax.numpy as jnp
from jax.experimental import pallas as pl
from jax.experimental.pallas import tpu as pltpu


# ----------------------------------------------------------------------------
# Pallas kernel: slab of Bt batch elements — MLP on S + reconstruction
# ----------------------------------------------------------------------------
def _svnet_kernel(s_ref, u_ref, vh_ref, w1_ref, b1_ref, w2_ref, b2_ref, y_ref,
                  *, use_bf16_matmul: bool):
    # s_ref : (Bt, K)     singular values of this slab
    # u_ref : (Bt, R, K)
    # vh_ref: (Bt, K, C)
    # w1_ref: (K, H), b1_ref: (1, H)
    # w2_ref: (H, K), b2_ref: (1, K)
    # y_ref : (Bt, R*C)   lane-dense output slab
    s = s_ref[...]                                                   # (Bt, K)

    # svlayers: Linear -> ReLU -> Linear -> ReLU, batched over the slab.
    h = jnp.dot(s, w1_ref[...], preferred_element_type=jnp.float32) + b1_ref[...]
    h = jnp.maximum(h, 0.0)                                          # (Bt, H)
    s_out = jnp.dot(h, w2_ref[...], preferred_element_type=jnp.float32) + b2_ref[...]
    s_out = jnp.maximum(s_out, 0.0)                                  # (Bt, K)

    # y = U @ diag(S_out) @ Vh == (U * S_out) @ Vh, batched over the slab.
    # Elementwise scaling stays in f32 (v5e VPU has no bf16 datapath).
    us = u_ref[...] * s_out[:, None, :]                              # (Bt, R, K)
    vh = vh_ref[...]                                                 # (Bt, K, C)
    if use_bf16_matmul:
        us = us.astype(jnp.bfloat16)
        vh = vh.astype(jnp.bfloat16)
    y = jnp.einsum("brk,bkc->brc", us, vh,
                   preferred_element_type=jnp.float32)               # (Bt, R, C)

    bt, r, c = y.shape
    y_ref[...] = y.reshape(bt, r * c).astype(y_ref.dtype)


def _choose_block_b(B: int) -> int:
    """Batch-slab size: collapse tiny batches into one grid step; for large B
    pick a multiple of 8 giving ~2 parallel grid steps (dual-TC on v7x)."""
    if B <= 8:
        return B                       # block == full batch dim (one step)
    bt = 8 * pl.cdiv(pl.cdiv(B, 2), 8)  # multiple of 8, ~2 grid steps
    return min(bt, 512)                 # far under any VMEM limit


def svnet_pallas(s, u, vh, w1, b1, w2, b2, *, block_b=None,
                 use_bf16_matmul=False):
    """s: (B,K), u: (B,R,K), vh: (B,K,C); weights as documented above."""
    B, R, K = u.shape
    C = vh.shape[-1]
    H = w1.shape[-1]

    bt = block_b if block_b is not None else _choose_block_b(B)
    b_pad = pl.cdiv(B, bt) * bt
    if b_pad != B:
        pad = b_pad - B
        s = jnp.pad(s, ((0, pad), (0, 0)))
        u = jnp.pad(u, ((0, pad), (0, 0), (0, 0)))
        vh = jnp.pad(vh, ((0, pad), (0, 0), (0, 0)))

    kernel = functools.partial(_svnet_kernel, use_bf16_matmul=use_bf16_matmul)

    y2d = pl.pallas_call(
        kernel,
        out_shape=jax.ShapeDtypeStruct((b_pad, R * C), u.dtype),
        grid_spec=pltpu.PrefetchScalarGridSpec(
            num_scalar_prefetch=0,
            grid=(b_pad // bt,),
            in_specs=[
                pl.BlockSpec((bt, K), lambda b: (b, 0)),        # S
                pl.BlockSpec((bt, R, K), lambda b: (b, 0, 0)),  # U
                pl.BlockSpec((bt, K, C), lambda b: (b, 0, 0)),  # Vh
                pl.BlockSpec((K, H), lambda b: (0, 0)),         # W1 (VMEM-resident)
                pl.BlockSpec((1, H), lambda b: (0, 0)),         # b1
                pl.BlockSpec((H, K), lambda b: (0, 0)),         # W2
                pl.BlockSpec((1, K), lambda b: (0, 0)),         # b2
            ],
            out_specs=pl.BlockSpec((bt, R * C), lambda b: (b, 0)),
        ),
        compiler_params=pltpu.CompilerParams(
            dimension_semantics=("parallel",),
            vmem_limit_bytes=32 * 1024 * 1024,
        ),
    )(s, u, vh, w1, b1, w2, b2)

    return y2d[:B].reshape(B, R, C)


# ----------------------------------------------------------------------------
# svNet forward (SVD glue in plain JAX, hot path in Pallas)
# ----------------------------------------------------------------------------
def svnet_forward(x, params, *, use_bf16_matmul=False):
    # x: (B, R, C)
    # TODO(synk): jnp.linalg.svd has no Pallas equivalent and dominates
    # end-to-end latency at these shapes; it stays in XLA.
    U, S, Vh = jnp.linalg.svd(x, full_matrices=False)  # U:(B,R,K) S:(B,K) Vh:(B,K,C)
    return svnet_pallas(
        S.astype(jnp.float32),
        U.astype(jnp.float32),
        Vh.astype(jnp.float32),
        params["w1"], params["b1"], params["w2"], params["b2"],
        use_bf16_matmul=use_bf16_matmul,
    )


def make_params(key, num_sv, hidden):
    """Deterministic eye-like init (utils_model.init_weights(eye=True)) plus a
    tiny deterministic perturbation so the MLP is not a pure identity."""
    k1, k2 = jax.random.split(key)

    def eye_like(rows, cols):
        return jnp.eye(rows, cols, dtype=jnp.float32)

    # torch Linear weight is (out, in); we store transposed (in, out).
    w1 = eye_like(hidden, num_sv).T + 1e-3 * jax.random.normal(k1, (num_sv, hidden), jnp.float32)
    b1 = jnp.zeros((1, hidden), jnp.float32)
    w2 = eye_like(num_sv, hidden).T + 1e-3 * jax.random.normal(k2, (hidden, num_sv), jnp.float32)
    b2 = jnp.zeros((1, num_sv), jnp.float32)
    return {"w1": w1, "b1": b1, "w2": w2, "b2": b2}


def svnet_reference(x, params):
    """Pure-JAX reference of the same forward pass."""
    U, S, Vh = jnp.linalg.svd(x, full_matrices=False)
    h = jnp.maximum(S @ params["w1"] + params["b1"][0], 0.0)
    s_out = jnp.maximum(h @ params["w2"] + params["b2"][0], 0.0)
    return jnp.einsum("brk,bk,bkc->brc", U, s_out, Vh)


if __name__ == "__main__":
    # Shapes consistent with the module: prms['rDim']=16, prms['cDim']=8,
    # svl_sizes=[32]  ->  num_sv = min(16, 8) = 8, hidden = 32, batch = 2.
    # R*C = 128, so the lane-dense output slab is exactly one full lane row.
    B, R, C = 2, 16, 8
    num_sv = min(R, C)
    hidden = 32

    key = jax.random.PRNGKey(0)
    kx, kp = jax.random.split(key)
    x = jax.random.normal(kx, (B, R, C), jnp.float32)
    params = make_params(kp, num_sv, hidden)

    y_ref = svnet_reference(x, params)

    # f32 matmul path: strict check against the pure-JAX reference.
    y = jax.block_until_ready(svnet_forward(x, params))
    assert y.shape == (B, R, C)
    assert jnp.allclose(y, y_ref, atol=1e-4, rtol=1e-4), "f32 mismatch vs reference"

    # bf16-operand matmul path (f32 accumulation): looser tolerance.
    y_bf16 = jax.block_until_ready(svnet_forward(x, params, use_bf16_matmul=True))
    assert jnp.allclose(y_bf16, y_ref, atol=5e-2, rtol=5e-2), "bf16 mismatch vs reference"

    print("KERNEL_OK")
</pallas_src>

<mosaic_0001>
module attributes {stable_mosaic.version = 11 : i64} {
  func.func @_svnet_kernel(%arg0: i32, %arg1: memref<2x8xf32, #tpu.memory_space<vmem>>, %arg2: memref<2x16x8xf32, #tpu.memory_space<vmem>>, %arg3: memref<2x8x8xf32, #tpu.memory_space<vmem>>, %arg4: memref<8x32xf32, #tpu.memory_space<vmem>>, %arg5: memref<1x32xf32, #tpu.memory_space<vmem>>, %arg6: memref<32x8xf32, #tpu.memory_space<vmem>>, %arg7: memref<1x8xf32, #tpu.memory_space<vmem>>, %arg8: memref<2x128xf32, #tpu.memory_space<vmem>>) attributes {dimension_semantics = [#tpu.dimension_semantics<parallel>], iteration_bounds = array<i64: 1>, scalar_prefetch = 0 : i64, scratch_operands = 0 : i64, tpu.core_type = #tpu.core_type<tc>, window_params = [{transform_indices = @transform_0, window_bounds = array<i64: 2, 8>}, {transform_indices = @transform_1, window_bounds = array<i64: 2, 16, 8>}, {transform_indices = @transform_2, window_bounds = array<i64: 2, 8, 8>}, {pipeline_mode = #tpu.pipeline_mode<synchronous>, transform_indices = @transform_3, window_bounds = array<i64: 8, 32>}, {pipeline_mode = #tpu.pipeline_mode<synchronous>, transform_indices = @transform_4, window_bounds = array<i64: 1, 32>}, {pipeline_mode = #tpu.pipeline_mode<synchronous>, transform_indices = @transform_5, window_bounds = array<i64: 32, 8>}, {pipeline_mode = #tpu.pipeline_mode<synchronous>, transform_indices = @transform_6, window_bounds = array<i64: 1, 8>}, {transform_indices = @transform_7, window_bounds = array<i64: 2, 128>}]} {
    %c0 = arith.constant 0 : index
    %c0_0 = arith.constant 0 : index
    %0 = vector.load %arg1[%c0, %c0_0] : memref<2x8xf32, #tpu.memory_space<vmem>>, vector<2x8xf32>
    %c0_1 = arith.constant 0 : index
    %c0_2 = arith.constant 0 : index
    %1 = vector.load %arg4[%c0_1, %c0_2] : memref<8x32xf32, #tpu.memory_space<vmem>>, vector<8x32xf32>
    %cst = arith.constant dense<0.000000e+00> : vector<2x32xf32>
    %2 = tpu.matmul %0, %1, %cst {dimension_numbers = #tpu.dot_dimension_numbers<[1], [0], [0], [1], [0, 0, 1, 1], [], []>} : vector<2x8xf32>, vector<8x32xf32>, vector<2x32xf32> -> vector<2x32xf32>
    %c0_3 = arith.constant 0 : index
    %c0_4 = arith.constant 0 : index
    %3 = vector.load %arg5[%c0_3, %c0_4] : memref<1x32xf32, #tpu.memory_space<vmem>>, vector<1x32xf32>
    %4 = vector.broadcast %3 : vector<1x32xf32> to vector<2x32xf32>
    %5 = arith.addf %2, %4 : vector<2x32xf32>
    %cst_5 = arith.constant 0.000000e+00 : f32
    %6 = vector.broadcast %cst_5 : f32 to vector<2x32xf32>
    %7 = arith.maximumf %5, %6 : vector<2x32xf32>
    %c0_6 = arith.constant 0 : index
    %c0_7 = arith.constant 0 : index
    %8 = vector.load %arg6[%c0_6, %c0_7] : memref<32x8xf32, #tpu.memory_space<vmem>>, vector<32x8xf32>
    %cst_8 = arith.constant dense<0.000000e+00> : vector<2x8xf32>
    %9 = tpu.matmul %7, %8, %cst_8 {dimension_numbers = #tpu.dot_dimension_numbers<[1], [0], [0], [1], [0, 0, 1, 1], [], []>} : vector<2x32xf32>, vector<32x8xf32>, vector<2x8xf32> -> vector<2x8xf32>
    %c0_9 = arith.constant 0 : index
    %c0_10 = arith.constant 0 : index
    %10 = vector.load %arg7[%c0_9, %c0_10] : memref<1x8xf32, #tpu.memory_space<vmem>>, vector<1x8xf32>
    %11 = vector.broadcast %10 : vector<1x8xf32> to vector<2x8xf32>
    %12 = arith.addf %9, %11 : vector<2x8xf32>
    %cst_11 = arith.constant 0.000000e+00 : f32
    %13 = vector.broadcast %cst_11 : f32 to vector<2x8xf32>
    %14 = arith.maximumf %12, %13 : vector<2x8xf32>
    %c0_12 = arith.constant 0 : index
    %c0_13 = arith.constant 0 : index
    %c0_14 = arith.constant 0 : index
    %15 = vector.load %arg2[%c0_12, %c0_13, %c0_14] : memref<2x16x8xf32, #tpu.memory_space<vmem>>, vector<2x16x8xf32>
    %16 = vector.shape_cast %14 : vector<2x8xf32> to vector<2x1x8xf32>
    %17 = vector.broadcast %16 : vector<2x1x8xf32> to vector<2x16x8xf32>
    %18 = arith.mulf %15, %17 : vector<2x16x8xf32>
    %c0_15 = arith.constant 0 : index
    %c0_16 = arith.constant 0 : index
    %c0_17 = arith.constant 0 : index
    %19 = vector.load %arg3[%c0_15, %c0_16, %c0_17] : memref<2x8x8xf32, #tpu.memory_space<vmem>>, vector<2x8x8xf32>
    "tpu.trace_start"() <{level = 10 : i32, message = "brk,bkc->brc"}> : () -> ()
    %cst_18 = arith.constant dense<0.000000e+00> : vector<2x16x8xf32>
    %20 = tpu.matmul %18, %19, %cst_18 {dimension_numbers = #tpu.dot_dimension_numbers<[2], [1], [1], [2], [0, 0, 0, 1, 1, 2], [0], [0]>} : vector<2x16x8xf32>, vector<2x8x8xf32>, vector<2x16x8xf32> -> vector<2x16x8xf32>
    "tpu.trace_stop"() : () -> ()
    %21 = vector.shape_cast %20 : vector<2x16x8xf32> to vector<2x128xf32>
    %c0_19 = arith.constant 0 : index
    %c0_20 = arith.constant 0 : index
    %22 = vector.load %arg8[%c0_19, %c0_20] : memref<2x128xf32, #tpu.memory_space<vmem>>, vector<2x128xf32>
    tpu.vector_store %arg8[%c0_19, %c0_20], %21 {strides = array<i32>} : memref<2x128xf32, #tpu.memory_space<vmem>>, vector<2x128xf32>,
    return
  }
  func.func @transform_0(%arg0: i32) -> (i32, i32) {
    %c0_i32 = arith.constant 0 : i32
    %c0_i32_0 = arith.constant 0 : i32
    return %arg0, %c0_i32 : i32, i32
  }
  func.func @transform_1(%arg0: i32) -> (i32, i32, i32) {
    %c0_i32 = arith.constant 0 : i32
    %c0_i32_0 = arith.constant 0 : i32
    %c0_i32_1 = arith.constant 0 : i32
    return %arg0, %c0_i32, %c0_i32_0 : i32, i32, i32
  }
  func.func @transform_2(%arg0: i32) -> (i32, i32, i32) {
    %c0_i32 = arith.constant 0 : i32
    %c0_i32_0 = arith.constant 0 : i32
    %c0_i32_1 = arith.constant 0 : i32
    return %arg0, %c0_i32, %c0_i32_0 : i32, i32, i32
  }
  func.func @transform_3(%arg0: i32) -> (i32, i32) {
    %c0_i32 = arith.constant 0 : i32
    %c0_i32_0 = arith.constant 0 : i32
    %c0_i32_1 = arith.constant 0 : i32
    return %c0_i32, %c0_i32_0 : i32, i32
  }
  func.func @transform_4(%arg0: i32) -> (i32, i32) {
    %c0_i32 = arith.constant 0 : i32
    %c0_i32_0 = arith.constant 0 : i32
    %c0_i32_1 = arith.constant 0 : i32
    return %c0_i32, %c0_i32_0 : i32, i32
  }
  func.func @transform_5(%arg0: i32) -> (i32, i32) {
    %c0_i32 = arith.constant 0 : i32
    %c0_i32_0 = arith.constant 0 : i32
    %c0_i32_1 = arith.constant 0 : i32
    return %c0_i32, %c0_i32_0 : i32, i32
  }
  func.func @transform_6(%arg0: i32) -> (i32, i32) {
    %c0_i32 = arith.constant 0 : i32
    %c0_i32_0 = arith.constant 0 : i32
    %c0_i32_1 = arith.constant 0 : i32
    return %c0_i32, %c0_i32_0 : i32, i32
  }
  func.func @transform_7(%arg0: i32) -> (i32, i32) {
    %c0_i32 = arith.constant 0 : i32
    %c0_i32_0 = arith.constant 0 : i32
    return %arg0, %c0_i32 : i32, i32
  }
}

</mosaic_0001>

<llo_original>
// kernel: tpu_custom_call.1
$region0: #{tpu_custom_call.1}
  #allocation0 [shape = 'u32[]', space=smem, size = 0x4, offset = 0x4, fixed_abs, tag = 'smem constant byte address 0x4 - core index']
  #allocation1 [shape = 'u32[72,128]{1,0:T(1,128)}', space=vmem, size = 0x9000, scoped, tag = 'internal scratch']
  %s0 = inlined_call_operand.vmem [shape: f32[2,8], index: 0, kind: input, shape index: {}]
  %s1 = inlined_call_operand.vmem [shape: f32[2,16,8], index: 1, kind: input, shape index: {}]
  %s2 = inlined_call_operand.vmem [shape: f32[2,8,8], index: 2, kind: input, shape index: {}]
  %s3 = inlined_call_operand.vmem [shape: f32[8,32], index: 3, kind: input, shape index: {}]
  %s4 = inlined_call_operand.vmem [shape: f32[1,32], index: 4, kind: input, shape index: {}]
  %s5 = inlined_call_operand.vmem [shape: f32[32,8], index: 5, kind: input, shape index: {}]
  %s6 = inlined_call_operand.vmem [shape: f32[1,8], index: 6, kind: input, shape index: {}]
  %s7 = inlined_call_operand.hbm [shape: f32[2,128], index: 7, kind: output, shape index: {}]
  %s8 = sld [smem:[#allocation0]]
  $region38: #{tpu_custom_call.1} parent=0
    _
  %s10 = ssub.s32 1, %s8
  %s11 = scalar_select 0, %s10, %s8
  $region1: #{tpu_custom_call.1} parent=0
    #allocation2 [shape = 'u8[1024]{0}', space=vmem, size = 0x400, scoped, tag = 'output window, operand 0, single buffered']
    #allocation3 [shape = 's32[1]{0}', space=sflag, size = 0x4, scoped, tag = 'scoped memory for tpu_custom_call.1']
    %12 = vsyncpa [#allocation3], 0
    // Predicated region
    $region2: #{tpu_custom_call.1} parent=1 // pred_check
      _
    $region3: #{tpu_custom_call.1} parent=1 // pred_check_branch
      %14 = sbr.rel (0) target = $region5
    $region4: #{tpu_custom_call.1} parent=1 // pred_region
      _
    $region5: #{tpu_custom_call.1} parent=1 // pred_fallthru
      _
    // Predicated region
    $region6: #{tpu_custom_call.1} parent=1 // pred_check
      _
    $region7: #{tpu_custom_call.1} parent=1 // pred_check_branch
      %16 = sbr.rel (0) target = $region9
    $region8: #{tpu_custom_call.1} parent=1 // pred_region
      _
    $region9: #{tpu_custom_call.1} parent=1 // pred_fallthru
      _
    // Predicated region
    $region10: #{tpu_custom_call.1} parent=1 // pred_check
      _
    $region11: #{tpu_custom_call.1} parent=1 // pred_check_branch
      %18 = sbr.rel (0) target = $region13
    $region12: #{tpu_custom_call.1} parent=1 // pred_region
      _
    $region13: #{tpu_custom_call.1} parent=1 // pred_fallthru
      _
    // Predicated region
    $region14: #{tpu_custom_call.1} parent=1 // pred_check
      _
    $region15: #{tpu_custom_call.1} parent=1 // pred_check_branch
      %20 = sbr.rel (0) target = $region17
    $region16: #{tpu_custom_call.1} parent=1 // pred_region
      _
    $region17: #{tpu_custom_call.1} parent=1 // pred_fallthru
      _
    // Predicated region
    $region18: #{tpu_custom_call.1} parent=1 // pred_check
      _
    $region19: #{tpu_custom_call.1} parent=1 // pred_check_branch
      %22 = sbr.rel (0) target = $region21
    $region20: #{tpu_custom_call.1} parent=1 // pred_region
      _
    $region21: #{tpu_custom_call.1} parent=1 // pred_fallthru
      _
    // Predicated region
    $region22: #{tpu_custom_call.1} parent=1 // pred_check
      _
    $region23: #{tpu_custom_call.1} parent=1 // pred_check_branch
      %24 = sbr.rel (0) target = $region25
    $region24: #{tpu_custom_call.1} parent=1 // pred_region
      _
    $region25: #{tpu_custom_call.1} parent=1 // pred_fallthru
      _
    // Predicated region
    $region26: #{tpu_custom_call.1} parent=1 // pred_check
      _
    $region27: #{tpu_custom_call.1} parent=1 // pred_check_branch
      %26 = sbr.rel (0) target = $region29
    $region28: #{tpu_custom_call.1} parent=1 // pred_region
      _
    $region29: #{tpu_custom_call.1} parent=1 // pred_fallthru
      _
    %v27 = vld [vmem:[%s0] sm:$0x3]
    %v28 = vld [vmem:[%s3] sm:$0xff]
    %v29 = vld [vmem:[%s4] sm:$0x1]
    %v31 = vperm.slane %v29, 0
    %vm33 = vcmask 64512
    %v35 = vsel %vm33, %v27, 0
    %37 = vmatpush.msra.mxu0 0.0
    %38 = vmatpush.msra.mxu0 0.0
    %39 = vmatpush.msra.mxu0 0.0
    %40 = vmatpush.msra.mxu0 0.0
    %41 = vmatpush.msra.mxu0 0.0
    %42 = vmatpush.msra.mxu0 0.0
    %43 = vmatpush.msra.mxu0 0.0
    %44 = vmatpush.msra.mxu0 0.0
    %45 = vmatpush.msra.mxu0 0.0
    %46 = vmatpush.msra.mxu0 0.0
    %47 = vmatpush.msra.mxu0 0.0
    %48 = vmatpush.msra.mxu0 0.0
    %49 = vmatpush.msra.mxu0 0.0
    %50 = vmatpush.msra.mxu0 0.0
    %51 = vmatpush.msra.mxu0 0.0
    %52 = vmatpush.msra.mxu0 %v28
    %53 = vmatmul.f32.gmra.mxu0 %v35
    %v54 = vpop.f32.mrf.mxu0
    %v55 = vadd.f32 %v31, %v54
    %56 = vdwg.mxu0
    %v57 = vmax.f32 %v55, 0.0
    %v58 = vld [vmem:[%s5] sm:$0xff]
    %v59 = vld [vmem:[%s5 + $0x8] sm:$0xff]
    %v60 = vld [vmem:[%s5 + $0x10] sm:$0xff]
    %v61 = vld [vmem:[%s5 + $0x18] sm:$0xff]
    %v62 = vld [vmem:[%s6] sm:$0x1]
    %v64 = vperm.slane %v62, 0
    %vm66 = vcmask 261120
    %v68 = vsel %vm66, %v57, 0
    %70 = vmatpush.msra.mxu0 0.0
    %71 = vmatpush.msra.mxu0 0.0
    %72 = vmatpush.msra.mxu0 0.0
    %73 = vmatpush.msra.mxu0 0.0
    %74 = vmatpush.msra.mxu0 0.0
    %75 = vmatpush.msra.mxu0 0.0
    %76 = vmatpush.msra.mxu0 0.0
    %77 = vmatpush.msra.mxu0 0.0
    %78 = vmatpush.msra.mxu0 0.0
    %79 = vmatpush.msra.mxu0 0.0
    %80 = vmatpush.msra.mxu0 0.0
    %81 = vmatpush.msra.mxu0 0.0
    %82 = vmatpush.msra.mxu0 %v61
    %83 = vmatpush.msra.mxu0 %v60
    %84 = vmatpush.msra.mxu0 %v59
    %85 = vmatpush.msra.mxu0 %v58
    %86 = vmatmul.f32.gmra.mxu0 %v68
    %v87 = vpop.f32.mrf.mxu0
    %v88 = vadd.f32 %v64, %v87
    %89 = vdwg.mxu0
    %v90 = vmax.f32 %v88, 0.0
    %v91 = vld [vmem:[%s1] sm:$0xff]
    %v92 = vld [vmem:[%s1 + $0x8] sm:$0xff]
    %v93 = vld [vmem:[%s1 + $0x10] sm:$0xff]
    %v94 = vld [vmem:[%s1 + $0x18] sm:$0xff]
    %v96 = vrot.slane %v90, 1
    %v97 = vperm.slane %v90, 0
    %v98 = vperm.slane %v96, 0
    %v101 = vmul.f32 %v91, %v97
    %v102 = vmul.f32 %v92, %v97
    %v103 = vmul.f32 %v93, %v98
    %v104 = vmul.f32 %v94, %v98
    %v105 = vld [vmem:[%s2] sm:$0xff]
    %v106 = vld [vmem:[%s2 + $0x8] sm:$0xff]
    %v108 = vsel %vm33, %v101, 0
    %v111 = vsel %vm33, %v102, 0
    %113 = vmatpush.msra.mxu0 0.0
    %114 = vmatpush.msra.mxu0 0.0
    %115 = vmatpush.msra.mxu0 0.0
    %116 = vmatpush.msra.mxu0 0.0
    %117 = vmatpush.msra.mxu0 0.0
    %118 = vmatpush.msra.mxu0 0.0
    %119 = vmatpush.msra.mxu0 0.0
    %120 = vmatpush.msra.mxu0 0.0
    %121 = vmatpush.msra.mxu0 0.0
    %122 = vmatpush.msra.mxu0 0.0
    %123 = vmatpush.msra.mxu0 0.0
    %124 = vmatpush.msra.mxu0 0.0
    %125 = vmatpush.msra.mxu0 0.0
    %126 = vmatpush.msra.mxu0 0.0
    %127 = vmatpush.msra.mxu0 0.0
    %128 = vmatpush.msra.mxu0 %v105
    %129 = vmatmul.f32.gmra.mxu0 %v108
    %v130 = vpop.f32.mrf.mxu0
    %v131 = vadd.f32 0.0, %v130
    %132 = vmatmul.f32.gmra.mxu0 %v111
    %v133 = vpop.f32.mrf.mxu0
    %v134 = vadd.f32 0.0, %v133
    %135 = vdwg.mxu0
    %v137 = vsel %vm33, %v103, 0
    %v140 = vsel %vm33, %v104, 0
    %142 = vmatpush.msra.mxu0 0.0
    %143 = vmatpush.msra.mxu0 0.0
    %144 = vmatpush.msra.mxu0 0.0
    %145 = vmatpush.msra.mxu0 0.0
    %146 = vmatpush.msra.mxu0 0.0
    %147 = vmatpush.msra.mxu0 0.0
    %148 = vmatpush.msra.mxu0 0.0
    %149 = vmatpush.msra.mxu0 0.0
    %150 = vmatpush.msra.mxu0 0.0
    %151 = vmatpush.msra.mxu0 0.0
    %152 = vmatpush.msra.mxu0 0.0
    %153 = vmatpush.msra.mxu0 0.0
    %154 = vmatpush.msra.mxu0 0.0
    %155 = vmatpush.msra.mxu0 0.0
    %156 = vmatpush.msra.mxu0 0.0
    %157 = vmatpush.msra.mxu0 %v106
    %158 = vmatmul.f32.gmra.mxu0 %v137
    %v159 = vpop.f32.mrf.mxu0
    %v160 = vadd.f32 0.0, %v159
    %161 = vmatmul.f32.gmra.mxu0 %v140
    %v162 = vpop.f32.mrf.mxu0
    %v163 = vadd.f32 0.0, %v162
    %164 = vdwg.mxu0
    %v165 = vrot.slane %v131, 4
    %vm166 = vcmask 1047556
    %v167 = vsel %vm166, 0.0, %v165
    %v169 = vunpack.c.l.s4 1983009808
    %v170 = vunpack.c.0.s8 %v169
    %v171 = vperm.slane %v131, %v170
    %v173 = vunpack.c.l.s4 1983009808
    %v174 = vunpack.c.0.s8 %v173
    %v175 = vperm.slane %v167, %v174
    %v176 = vrot.slane %v160, 4
    %v177 = vsel %vm166, 0.0, %v176
    %v179 = vunpack.c.l.s4 1983009808
    %v180 = vunpack.c.0.s8 %v179
    %v181 = vperm.slane %v160, %v180
    %v183 = vunpack.c.l.s4 1983009808
    %v184 = vunpack.c.0.s8 %v183
    %v185 = vperm.slane %v177, %v184
    %v186 = vrot.slane %v181, 4
    %v187 = vsel %vm166, %v186, %v171
    %v188 = vrot.slane %v171, 4
    %v189 = vsel %vm166, %v181, %v188
    %v191 = vunpack.c.l.s4 1934713408
    %v192 = vunpack.c.0.s8 %v191
    %v193 = vperm.slane %v187, %v192
    %v195 = vunpack.c.l.s4 1934713408
    %v196 = vunpack.c.0.s8 %v195
    %v197 = vperm.slane %v189, %v196
    %v198 = vrot.slane %v185, 4
    %v199 = vsel %vm166, %v198, %v175
    %v200 = vrot.slane %v175, 4
    %v201 = vsel %vm166, %v185, %v200
    %v203 = vunpack.c.l.s4 1934713408
    %v204 = vunpack.c.0.s8 %v203
    %v205 = vperm.slane %v199, %v204
    %v207 = vunpack.c.l.s4 1934713408
    %v208 = vunpack.c.0.s8 %v207
    %v209 = vperm.slane %v201, %v208
    %v210 = vrot.slane %v193, 4
    %v211 = vsel %vm166, 0.0, %v210
    %v212 = vrot.slane %v197, 4
    %v213 = vsel %vm166, 0.0, %v212
    %v214 = vrot.slane %v205, 4
    %v215 = vsel %vm166, 0.0, %v214
    %v216 = vrot.slane %v209, 4
    %v217 = vsel %vm166, 0.0, %v216
    %v218 = vrot.slane %v134, 4
    %v219 = vsel %vm166, 0.0, %v218
    %v221 = vunpack.c.l.s4 1983009808
    %v222 = vunpack.c.0.s8 %v221
    %v223 = vperm.slane %v134, %v222
    %v225 = vunpack.c.l.s4 1983009808
    %v226 = vunpack.c.0.s8 %v225
    %v227 = vperm.slane %v219, %v226
    %v228 = vrot.slane %v163, 4
    %v229 = vsel %vm166, 0.0, %v228
    %v231 = vunpack.c.l.s4 1983009808
    %v232 = vunpack.c.0.s8 %v231
    %v233 = vperm.slane %v163, %v232
    %v235 = vunpack.c.l.s4 1983009808
    %v236 = vunpack.c.0.s8 %v235
    %v237 = vperm.slane %v229, %v236
    %v238 = vrot.slane %v233, 4
    %v239 = vsel %vm166, %v238, %v223
    %v240 = vrot.slane %v223, 4
    %v241 = vsel %vm166, %v233, %v240
    %v243 = vunpack.c.l.s4 1934713408
    %v244 = vunpack.c.0.s8 %v243
    %v245 = vperm.slane %v239, %v244
    %v247 = vunpack.c.l.s4 1934713408
    %v248 = vunpack.c.0.s8 %v247
    %v249 = vperm.slane %v241, %v248
    %v250 = vrot.slane %v237, 4
    %v251 = vsel %vm166, %v250, %v227
    %v252 = vrot.slane %v227, 4
    %v253 = vsel %vm166, %v237, %v252
    %v255 = vunpack.c.l.s4 1934713408
    %v256 = vunpack.c.0.s8 %v255
    %v257 = vperm.slane %v251, %v256
    %v259 = vunpack.c.l.s4 1934713408
    %v260 = vunpack.c.0.s8 %v259
    %v261 = vperm.slane %v253, %v260
    %v262 = vrot.slane %v245, 4
    %v263 = vsel %vm166, 0.0, %v262
    %v264 = vrot.slane %v249, 4
    %v265 = vsel %vm166, 0.0, %v264
    %v266 = vrot.slane %v257, 4
    %v267 = vsel %vm166, 0.0, %v266
    %v268 = vrot.slane %v261, 4
    %v269 = vsel %vm166, 0.0, %v268
    %271 = vrot.lane.b32.xlu0 %v211, 8
    %v272 = vpop.permute.xlu0 %271
    %275 = vrot.lane.b32.xlu0 %v197, 16
    %v276 = vpop.permute.xlu0 %275
    %279 = vrot.lane.b32.xlu0 %v213, 24
    %v280 = vpop.permute.xlu0 %279
    %283 = vrot.lane.b32.xlu0 %v205, 32
    %v284 = vpop.permute.xlu0 %283
    %287 = vrot.lane.b32.xlu0 %v215, 40
    %v288 = vpop.permute.xlu0 %287
    %291 = vrot.lane.b32.xlu0 %v209, 48
    %v292 = vpop.permute.xlu0 %291
    %295 = vrot.lane.b32.xlu0 %v217, 56
    %v296 = vpop.permute.xlu0 %295
    %299 = vrot.lane.b32.xlu0 %v245, 64
    %v300 = vpop.permute.xlu0 %299
    %303 = vrot.lane.b32.xlu0 %v263, 72
    %v304 = vpop.permute.xlu0 %303
    %307 = vrot.lane.b32.xlu0 %v249, 80
    %v308 = vpop.permute.xlu0 %307
    %311 = vrot.lane.b32.xlu0 %v265, 88
    %v312 = vpop.permute.xlu0 %311
    %315 = vrot.lane.b32.xlu0 %v257, 96
    %v316 = vpop.permute.xlu0 %315
    %319 = vrot.lane.b32.xlu0 %v267, 104
    %v320 = vpop.permute.xlu0 %319
    %323 = vrot.lane.b32.xlu0 %v261, 112
    %v324 = vpop.permute.xlu0 %323
    %327 = vrot.lane.b32.xlu0 %v269, 120
    %v328 = vpop.permute.xlu0 %327
    %v330 = vsel %vm33, %v193, %v272
    %vm331 = vcmask 130048
    %v332 = vsel %vm331, %v330, %v276
    %vm333 = vcmask 195584
    %v334 = vsel %vm333, %v332, %v280
    %v335 = vsel %vm66, %v334, %v284
    %vm336 = vcmask 326656
    %v337 = vsel %vm336, %v335, %v288
    %vm338 = vcmask 392192
    %v339 = vsel %vm338, %v337, %v292
    %vm340 = vcmask 457728
    %v341 = vsel %vm340, %v339, %v296
    %vm342 = vcmask 523264
    %v343 = vsel %vm342, %v341, %v300
    %vm344 = vcmask 588800
    %v345 = vsel %vm344, %v343, %v304
    %vm346 = vcmask 654336
    %v347 = vsel %vm346, %v345, %v308
    %vm348 = vcmask 719872
    %v349 = vsel %vm348, %v347, %v312
    %vm350 = vcmask 785408
    %v351 = vsel %vm350, %v349, %v316
    %vm352 = vcmask 850944
    %v353 = vsel %vm352, %v351, %v320
    %vm354 = vcmask 916480
    %v355 = vsel %vm354, %v353, %v324
    %vm356 = vcmask 982016
    %v357 = vsel %vm356, %v355, %v328
    %358 = vst [vmem:[#allocation2] sm:$0x3] %v357
    // Predicated region
    $region30: #{tpu_custom_call.1} parent=1 // pred_check
      _
    $region31: #{tpu_custom_call.1} parent=1 // pred_check_branch
      %360 = sbr.rel (0) target = $region33
    $region32: #{tpu_custom_call.1} parent=1 // pred_region
      %362 = vsyncadd [#allocation3], 0
      %s364 = sshll.u32 [#allocation2], 4
      %s365 = int_to_ptr.vmem [resolvable:$true] %s364
      %s366 = sshll.u32 %s7, 4
      %s367 = int_to_ptr.hbm [resolvable:$true] %s366
      %369 = dma.vmem_to_hbm [thread:$0]  %s365, 32, %s367, [#allocation3]
    $region33: #{tpu_custom_call.1} parent=1 // pred_fallthru
      _
    // Predicated region
    $region34: #{tpu_custom_call.1} parent=1 // pred_check
      _
    $region35: #{tpu_custom_call.1} parent=1 // pred_check_branch
      %371 = sbr.rel (0) target = $region37
    $region36: #{tpu_custom_call.1} parent=1 // pred_region
      %373 = dma.done [#allocation3], 32
    $region37: #{tpu_custom_call.1} parent=1 // pred_fallthru
      _
    %374 = vsyncpa [#allocation3], 1

</llo_original>
